<compile_context>
chip_gen: v6e
topology: v6e:2x2x1
jax: 0.10.0
libtpu: 0.0.40
codegen_flags: <defaults>
</compile_context>

<pallas_src>
import functools

import jax
import jax.numpy as jnp
from jax import lax
from jax.experimental import pallas as pl
from jax.experimental.pallas import tpu as pltpu


def _round_up(x, m):
    return (x + m - 1) // m * m


# ------------------------------ Pallas kernel -------------------------------

def _ca_net_kernel(x_ref, w_ref, b_ref, eps_ref, out_ref):
    """Fused Linear + bias + ReLU + mu/logvar split + reparametrize.

    x_ref   : (TM, Kp)    text-embedding rows (zero-padded to Kp)
    w_ref   : (Kp, 2*Cp)  packed weight [W_mu | W_logvar], each half padded
    b_ref   : (1, 2*Cp)   packed bias (f32), same column layout as w_ref
    eps_ref : (TM, Cp)    standard-normal noise (f32)
    out_ref : (TM, 3*Cp)  fused lane-dense output [c_code | mu | logvar]
    """
    cp = eps_ref.shape[-1]
    x = x_ref[...]
    if x.dtype != w_ref.dtype:                 # in-kernel cast, no extra HBM pass
        x = x.astype(w_ref.dtype)
    y = jnp.dot(x, w_ref[...], preferred_element_type=jnp.float32)
    y = jnp.maximum(y + b_ref[...], 0.0)       # fc + bias + ReLU
    mu = y[:, :cp]                             # split on a 128-lane boundary
    logvar = y[:, cp:]
    std = jnp.exp(0.5 * logvar)                # logvar.mul(0.5).exp()
    out_ref[:, :cp] = eps_ref[...] * std + mu  # eps.mul(std).add_(mu)
    out_ref[:, cp:2 * cp] = mu
    out_ref[:, 2 * cp:] = logvar


# ---------------------- one-time parameter packing --------------------------

def pack_ca_net_params(weight, bias, *, c_dim, matmul_dtype=jnp.float32):
    """Pack the PyTorch nn.Linear params into the kernel's layout (done once).

    weight : (2*c_dim, t_dim) f32   (PyTorch nn.Linear layout)
    bias   : (2*c_dim,)       f32
    Returns (w_packed: (Kp, 2*Cp) matmul_dtype, b_packed: (1, 2*Cp) f32).
    """
    two_c, t_dim = weight.shape
    assert two_c == 2 * c_dim
    kp = _round_up(t_dim, 128)
    cp = _round_up(c_dim, 128)
    w = jnp.zeros((kp, 2 * cp), matmul_dtype)
    w = w.at[:t_dim, :c_dim].set(weight[:c_dim].T.astype(matmul_dtype))
    w = w.at[:t_dim, cp:cp + c_dim].set(weight[c_dim:].T.astype(matmul_dtype))
    b = jnp.zeros((1, 2 * cp), jnp.float32)
    b = b.at[0, :c_dim].set(bias[:c_dim]).at[0, cp:cp + c_dim].set(bias[c_dim:])
    return w, b


# -------------------------------- wrapper ------------------------------------

def ca_net_pallas(text_embedding, w_packed, b_packed, eps, *, c_dim, t_dim):
    """CA_NET.forward -> (c_code, mu, logvar).

    text_embedding : (B, t_dim) f32
    w_packed       : (Kp, 2*Cp) from pack_ca_net_params
    b_packed       : (1, 2*Cp)  from pack_ca_net_params
    eps            : (B, c_dim) f32 standard-normal noise
    """
    B, td = text_embedding.shape
    assert td == t_dim
    kp, two_cp = w_packed.shape
    cp = two_cp // 2
    assert eps.shape == (B, c_dim)

    # Row tile: single grid program for small batches; tile is a multiple of 16
    # (bf16 sublane packing).  Large batches shard with tm=256 so any megacore
    # split has enough per-core work to amortize the duplicated weight DMA.
    if B <= 512:
        tm = max(16, _round_up(B, 16))
        bp = tm
    else:
        tm = 256
        bp = _round_up(B, tm)
    grid = (bp // tm,)

    # Only pad when actually needed (no-op at the real CA_NET sizes).
    x = text_embedding
    if (bp, kp) != (B, t_dim):
        x = jnp.zeros((bp, kp), text_embedding.dtype).at[:B, :t_dim].set(
            text_embedding)
    e = eps
    if (bp, cp) != (B, c_dim):
        e = jnp.zeros((bp, cp), eps.dtype).at[:B, :c_dim].set(eps)

    # Tight VMEM request: double-buffered per-tile footprint, small cap.
    w_item = jnp.dtype(w_packed.dtype).itemsize
    x_item = jnp.dtype(x.dtype).itemsize
    vmem_est = (2 * tm * kp * x_item          # x tile
                + 2 * kp * two_cp * w_item    # packed weight
                + 2 * two_cp * 4              # packed bias
                + 2 * tm * cp * 4             # eps tile
                + 2 * tm * 3 * cp * 4)        # fused output tile
    vmem_limit = int(min(48 << 20, max(4 << 20, 2 * vmem_est)))

    out = pl.pallas_call(
        _ca_net_kernel,
        out_shape=jax.ShapeDtypeStruct((bp, 3 * cp), jnp.float32),
        grid_spec=pltpu.PrefetchScalarGridSpec(
            num_scalar_prefetch=0,
            grid=grid,
            in_specs=[
                pl.BlockSpec((tm, kp), lambda i: (i, 0)),
                pl.BlockSpec((kp, two_cp), lambda i: (0, 0)),
                pl.BlockSpec((1, two_cp), lambda i: (0, 0)),
                pl.BlockSpec((tm, cp), lambda i: (i, 0)),
            ],
            out_specs=pl.BlockSpec((tm, 3 * cp), lambda i: (i, 0)),
        ),
        compiler_params=pltpu.CompilerParams(
            dimension_semantics=("parallel",),
            vmem_limit_bytes=vmem_limit,
        ),
    )(x, w_packed, b_packed, e)

    # Slice the fused [c_code | mu | logvar] slab and strip padding.
    c_code = out[:B, :c_dim]
    mu = out[:B, cp:cp + c_dim]
    logvar = out[:B, 2 * cp:2 * cp + c_dim]
    return c_code, mu, logvar


# --------------------------------- main --------------------------------------

if __name__ == "__main__":
    key = jax.random.PRNGKey(0)
    k_w, k_b, k_x, k_eps = jax.random.split(key, 4)

    # cfg.TEXT.DIMENSION = 64, cfg.VIDEO_LEN = 4, cfg.GAN.CONDITION_DIM = 128
    text_dim, video_len, c_dim = 64, 4, 128
    t_dim = text_dim * video_len
    batch = 16

    weight = 0.05 * jax.random.normal(k_w, (2 * c_dim, t_dim), jnp.float32)
    bias = 0.05 * jax.random.normal(k_b, (2 * c_dim,), jnp.float32)
    text_embedding = jax.random.normal(k_x, (batch, t_dim), jnp.float32)
    # TODO(synk): eps is drawn with jax.random (same N(0,1) distribution as
    # torch's .normal_(), but not the same RNG stream as the PyTorch reference).
    eps = jax.random.normal(k_eps, (batch, c_dim), jnp.float32)

    # One-time parameter packing (f32 matmul for exact parity; bf16 is opt-in).
    w_packed, b_packed = pack_ca_net_params(weight, bias, c_dim=c_dim)

    fwd = jax.jit(functools.partial(ca_net_pallas, c_dim=c_dim, t_dim=t_dim))
    c_code, mu, logvar = fwd(text_embedding, w_packed, b_packed, eps)
    jax.block_until_ready((c_code, mu, logvar))

    # Plain-JAX f32 reference.
    y_ref = jnp.maximum(
        jnp.matmul(text_embedding, weight.T, precision=lax.Precision.HIGHEST)
        + bias, 0.0)
    mu_ref, lv_ref = y_ref[:, :c_dim], y_ref[:, c_dim:]
    c_ref = eps * jnp.exp(0.5 * lv_ref) + mu_ref

    assert c_code.shape == (batch, c_dim), c_code.shape
    assert mu.shape == (batch, c_dim) and logvar.shape == (batch, c_dim)
    assert bool(jnp.all(jnp.isfinite(c_code)))
    assert bool(jnp.allclose(mu, mu_ref, atol=1e-2, rtol=1e-2))
    assert bool(jnp.allclose(logvar, lv_ref, atol=1e-2, rtol=1e-2))
    assert bool(jnp.allclose(c_code, c_ref, atol=1e-2, rtol=1e-2))
    print("KERNEL_OK")
</pallas_src>

<mosaic_0001>
module attributes {stable_mosaic.version = 11 : i64} {
  func.func @_ca_net_kernel(%arg0: i32, %arg1: memref<16x256xf32, #tpu.memory_space<vmem>>, %arg2: memref<256x256xf32, #tpu.memory_space<vmem>>, %arg3: memref<1x256xf32, #tpu.memory_space<vmem>>, %arg4: memref<16x128xf32, #tpu.memory_space<vmem>>, %arg5: memref<16x384xf32, #tpu.memory_space<vmem>>) attributes {dimension_semantics = [#tpu.dimension_semantics<parallel>], iteration_bounds = array<i64: 1>, scalar_prefetch = 0 : i64, scratch_operands = 0 : i64, tpu.core_type = #tpu.core_type<tc>, window_params = [{transform_indices = @transform_0, window_bounds = array<i64: 16, 256>}, {pipeline_mode = #tpu.pipeline_mode<synchronous>, transform_indices = @transform_1, window_bounds = array<i64: 256, 256>}, {pipeline_mode = #tpu.pipeline_mode<synchronous>, transform_indices = @transform_2, window_bounds = array<i64: 1, 256>}, {transform_indices = @transform_3, window_bounds = array<i64: 16, 128>}, {transform_indices = @transform_4, window_bounds = array<i64: 16, 384>}]} {
    %c0 = arith.constant 0 : index
    %c0_0 = arith.constant 0 : index
    %0 = vector.load %arg1[%c0, %c0_0] : memref<16x256xf32, #tpu.memory_space<vmem>>, vector<16x256xf32>
    %c0_1 = arith.constant 0 : index
    %c0_2 = arith.constant 0 : index
    %1 = vector.load %arg2[%c0_1, %c0_2] : memref<256x256xf32, #tpu.memory_space<vmem>>, vector<256x256xf32>
    %cst = arith.constant dense<0.000000e+00> : vector<16x256xf32>
    %2 = tpu.matmul %0, %1, %cst {dimension_numbers = #tpu.dot_dimension_numbers<[1], [0], [0], [1], [0, 0, 1, 1], [], []>} : vector<16x256xf32>, vector<256x256xf32>, vector<16x256xf32> -> vector<16x256xf32>
    %c0_3 = arith.constant 0 : index
    %c0_4 = arith.constant 0 : index
    %3 = vector.load %arg3[%c0_3, %c0_4] : memref<1x256xf32, #tpu.memory_space<vmem>>, vector<1x256xf32>
    %4 = vector.broadcast %3 : vector<1x256xf32> to vector<16x256xf32>
    %5 = arith.addf %2, %4 : vector<16x256xf32>
    %cst_5 = arith.constant 0.000000e+00 : f32
    %6 = vector.broadcast %cst_5 : f32 to vector<16x256xf32>
    %7 = arith.maximumf %5, %6 : vector<16x256xf32>
    %8 = vector.extract_strided_slice %7 {offsets = [0, 0], sizes = [16, 128], strides = [1, 1]} : vector<16x256xf32> to vector<16x128xf32>
    %9 = vector.extract_strided_slice %7 {offsets = [0, 128], sizes = [16, 128], strides = [1, 1]} : vector<16x256xf32> to vector<16x128xf32>
    %cst_6 = arith.constant 5.000000e-01 : f32
    %10 = vector.broadcast %cst_6 : f32 to vector<16x128xf32>
    %11 = arith.mulf %10, %9 : vector<16x128xf32>
    %12 = math.exp %11 : vector<16x128xf32>
    %c0_7 = arith.constant 0 : index
    %c0_8 = arith.constant 0 : index
    %13 = vector.load %arg4[%c0_7, %c0_8] : memref<16x128xf32, #tpu.memory_space<vmem>>, vector<16x128xf32>
    %14 = arith.mulf %13, %12 : vector<16x128xf32>
    %15 = arith.addf %14, %8 : vector<16x128xf32>
    %c0_9 = arith.constant 0 : index
    %c0_10 = arith.constant 0 : index
    %16 = vector.load %arg5[%c0_9, %c0_10] : memref<16x384xf32, #tpu.memory_space<vmem>>, vector<16x128xf32>
    tpu.vector_store %arg5[%c0_9, %c0_10], %15 {strides = array<i32>} : memref<16x384xf32, #tpu.memory_space<vmem>>, vector<16x128xf32>,
    %c0_11 = arith.constant 0 : index
    %c128 = arith.constant 128 : index
    %17 = vector.load %arg5[%c0_11, %c128] : memref<16x384xf32, #tpu.memory_space<vmem>>, vector<16x128xf32>
    tpu.vector_store %arg5[%c0_11, %c128], %8 {strides = array<i32>} : memref<16x384xf32, #tpu.memory_space<vmem>>, vector<16x128xf32>,
    %c0_12 = arith.constant 0 : index
    %c256 = arith.constant 256 : index
    %18 = vector.load %arg5[%c0_12, %c256] : memref<16x384xf32, #tpu.memory_space<vmem>>, vector<16x128xf32>
    tpu.vector_store %arg5[%c0_12, %c256], %9 {strides = array<i32>} : memref<16x384xf32, #tpu.memory_space<vmem>>, vector<16x128xf32>,
    return
  }
  func.func @transform_0(%arg0: i32) -> (i32, i32) {
    %c0_i32 = arith.constant 0 : i32
    %c0_i32_0 = arith.constant 0 : i32
    return %arg0, %c0_i32 : i32, i32
  }
  func.func @transform_1(%arg0: i32) -> (i32, i32) {
    %c0_i32 = arith.constant 0 : i32
    %c0_i32_0 = arith.constant 0 : i32
    %c0_i32_1 = arith.constant 0 : i32
    return %c0_i32, %c0_i32_0 : i32, i32
  }
  func.func @transform_2(%arg0: i32) -> (i32, i32) {
    %c0_i32 = arith.constant 0 : i32
    %c0_i32_0 = arith.constant 0 : i32
    %c0_i32_1 = arith.constant 0 : i32
    return %c0_i32, %c0_i32_0 : i32, i32
  }
  func.func @transform_3(%arg0: i32) -> (i32, i32) {
    %c0_i32 = arith.constant 0 : i32
    %c0_i32_0 = arith.constant 0 : i32
    return %arg0, %c0_i32 : i32, i32
  }
  func.func @transform_4(%arg0: i32) -> (i32, i32) {
    %c0_i32 = arith.constant 0 : i32
    %c0_i32_0 = arith.constant 0 : i32
    return %arg0, %c0_i32 : i32, i32
  }
}

</mosaic_0001>

<llo_original>
// kernel: ca_net_pallas.1
$region0: #{ca_net_pallas.1}
  #allocation0 [shape = 'u32[]', space=smem, size = 0x4, offset = 0x4, fixed_abs, tag = 'smem constant byte address 0x4 - core index']
  #allocation1 [shape = 'u32[144,128]{1,0:T(1,128)}', space=vmem, size = 0x12000, scoped, tag = 'internal scratch']
  %s0 = inlined_call_operand.hbm [shape: f32[16,256], index: 0, kind: input, shape index: {}]
  %s1 = inlined_call_operand.hbm [shape: f32[256,256], index: 1, kind: input, shape index: {}]
  %s2 = inlined_call_operand.vmem [shape: f32[1,256], index: 2, kind: input, shape index: {}]
  %s3 = inlined_call_operand.hbm [shape: f32[16,128], index: 3, kind: input, shape index: {}]
  %s4 = inlined_call_operand.vmem [shape: f32[16,384], index: 4, kind: output, shape index: {}]
  %s5 = sld [smem:[#allocation0]]
  $region38: #{ca_net_pallas.1} parent=0
    _
  %s7 = ssub.s32 1, %s5
  %s8 = scalar_select 0, %s7, %s5
  $region1: #{ca_net_pallas.1} parent=0
    #allocation2 [shape = 'u8[16384]{0}', space=vmem, size = 0x4000, scoped, tag = 'input window, operand 0, single buffered']
    #allocation3 [shape = 's32[1]{0}', space=sflag, size = 0x4, scoped, tag = 'scoped memory for ca_net_pallas.1']
    #allocation4 [shape = 'u8[262144]{0}', space=vmem, size = 0x40000, scoped, tag = 'input window, operand 1, single buffered']
    #allocation5 [shape = 's32[1]{0}', space=sflag, size = 0x4, scoped, tag = 'scoped memory for ca_net_pallas.1']
    #allocation6 [shape = 'u8[8192]{0}', space=vmem, size = 0x2000, scoped, tag = 'input window, operand 3, single buffered']
    %9 = vsyncpa [#allocation3], 0
    %10 = vsyncpa [#allocation5], 0
    // Predicated region
    $region2: #{ca_net_pallas.1} parent=1 // pred_check
      _
    $region3: #{ca_net_pallas.1} parent=1 // pred_check_branch
      %12 = sbr.rel (0) target = $region5
    $region4: #{ca_net_pallas.1} parent=1 // pred_region
      %s14 = ssub.s32 512, 512
      %15 = vsyncadd [#allocation3], %s14
      %s16 = sshll.u32 [#allocation2], 4
      %s17 = int_to_ptr.vmem [resolvable:$true] %s16
      %22 = dma.hbm_to_vmem [thread:$0]  %s0, 512, %s17, [#allocation3], 256, 256, 16
    $region5: #{ca_net_pallas.1} parent=1 // pred_fallthru
      _
    // Predicated region
    $region6: #{ca_net_pallas.1} parent=1 // pred_check
      _
    $region7: #{ca_net_pallas.1} parent=1 // pred_check_branch
      %24 = sbr.rel (0) target = $region9
    $region8: #{ca_net_pallas.1} parent=1 // pred_region
      %s26 = ssub.s32 8192, 8192
      %27 = vsyncadd [#allocation5], %s26
      %s28 = sshll.u32 [#allocation4], 4
      %s29 = int_to_ptr.vmem [resolvable:$true] %s28
      %34 = dma.hbm_to_vmem [thread:$0]  %s1, 8192, %s29, [#allocation5], 256, 256, 16
    $region9: #{ca_net_pallas.1} parent=1 // pred_fallthru
      _
    // Predicated region
    $region10: #{ca_net_pallas.1} parent=1 // pred_check
      _
    $region11: #{ca_net_pallas.1} parent=1 // pred_check_branch
      %36 = sbr.rel (0) target = $region13
    $region12: #{ca_net_pallas.1} parent=1 // pred_region
      _
    $region13: #{ca_net_pallas.1} parent=1 // pred_fallthru
      _
    // Predicated region
    $region14: #{ca_net_pallas.1} parent=1 // pred_check
      _
    $region15: #{ca_net_pallas.1} parent=1 // pred_check_branch
      %38 = sbr.rel (0) target = $region17
    $region16: #{ca_net_pallas.1} parent=1 // pred_region
      %s40 = ssub.s32 256, 256
      %41 = vsyncadd [#allocation5], %s40
      %s42 = sshll.u32 [#allocation6], 4
      %s43 = int_to_ptr.vmem [resolvable:$true] %s42
      %48 = dma.hbm_to_vmem [thread:$0]  %s3, 256, %s43, [#allocation5], 128, 128, 8
    $region17: #{ca_net_pallas.1} parent=1 // pred_fallthru
      _
    // Predicated region
    $region18: #{ca_net_pallas.1} parent=1 // pred_check
      _
    $region19: #{ca_net_pallas.1} parent=1 // pred_check_branch
      %50 = sbr.rel (0) target = $region21
    $region20: #{ca_net_pallas.1} parent=1 // pred_region
      %51 = dma.done [#allocation3], 512
    $region21: #{ca_net_pallas.1} parent=1 // pred_fallthru
      _
    // Predicated region
    $region22: #{ca_net_pallas.1} parent=1 // pred_check
      _
    $region23: #{ca_net_pallas.1} parent=1 // pred_check_branch
      %53 = sbr.rel (0) target = $region25
    $region24: #{ca_net_pallas.1} parent=1 // pred_region
      %54 = dma.done [#allocation5], 8192
    $region25: #{ca_net_pallas.1} parent=1 // pred_fallthru
      _
    // Predicated region
    $region26: #{ca_net_pallas.1} parent=1 // pred_check
      _
    $region27: #{ca_net_pallas.1} parent=1 // pred_check_branch
      %56 = sbr.rel (0) target = $region29
    $region28: #{ca_net_pallas.1} parent=1 // pred_region
      %57 = dma.done [#allocation5], 256
    $region29: #{ca_net_pallas.1} parent=1 // pred_fallthru
      _
    %v58 = vld [vmem:[#allocation2] sm:$0xff]
    %v59 = vld [vmem:[#allocation2 + $0x8] sm:$0xff]
    %v60 = vld [vmem:[#allocation2 + $0x10] sm:$0xff]
    %v61 = vld [vmem:[#allocation2 + $0x18] sm:$0xff]
    %v62 = vld [vmem:[#allocation4] sm:$0xff]
    %v63 = vld [vmem:[#allocation4 + $0x8] sm:$0xff]
    %v64 = vld [vmem:[#allocation4 + $0x10] sm:$0xff]
    %v65 = vld [vmem:[#allocation4 + $0x18] sm:$0xff]
    %v66 = vld [vmem:[#allocation4 + $0x20] sm:$0xff]
    %v67 = vld [vmem:[#allocation4 + $0x28] sm:$0xff]
    %v68 = vld [vmem:[#allocation4 + $0x30] sm:$0xff]
    %v69 = vld [vmem:[#allocation4 + $0x38] sm:$0xff]
    %v70 = vld [vmem:[#allocation4 + $0x40] sm:$0xff]
    %v71 = vld [vmem:[#allocation4 + $0x48] sm:$0xff]
    %v72 = vld [vmem:[#allocation4 + $0x50] sm:$0xff]
    %v73 = vld [vmem:[#allocation4 + $0x58] sm:$0xff]
    %v74 = vld [vmem:[#allocation4 + $0x60] sm:$0xff]
    %v75 = vld [vmem:[#allocation4 + $0x68] sm:$0xff]
    %v76 = vld [vmem:[#allocation4 + $0x70] sm:$0xff]
    %v77 = vld [vmem:[#allocation4 + $0x78] sm:$0xff]
    %v78 = vld [vmem:[#allocation4 + $0x80] sm:$0xff]
    %v79 = vld [vmem:[#allocation4 + $0x88] sm:$0xff]
    %v80 = vld [vmem:[#allocation4 + $0x90] sm:$0xff]
    %v81 = vld [vmem:[#allocation4 + $0x98] sm:$0xff]
    %v82 = vld [vmem:[#allocation4 + $0xa0] sm:$0xff]
    %v83 = vld [vmem:[#allocation4 + $0xa8] sm:$0xff]
    %v84 = vld [vmem:[#allocation4 + $0xb0] sm:$0xff]
    %v85 = vld [vmem:[#allocation4 + $0xb8] sm:$0xff]
    %v86 = vld [vmem:[#allocation4 + $0xc0] sm:$0xff]
    %v87 = vld [vmem:[#allocation4 + $0xc8] sm:$0xff]
    %v88 = vld [vmem:[#allocation4 + $0xd0] sm:$0xff]
    %v89 = vld [vmem:[#allocation4 + $0xd8] sm:$0xff]
    %v90 = vld [vmem:[#allocation4 + $0xe0] sm:$0xff]
    %v91 = vld [vmem:[#allocation4 + $0xe8] sm:$0xff]
    %v92 = vld [vmem:[#allocation4 + $0xf0] sm:$0xff]
    %v93 = vld [vmem:[#allocation4 + $0xf8] sm:$0xff]
    %v94 = vld [vmem:[#allocation4 + $0x100] sm:$0xff]
    %v95 = vld [vmem:[#allocation4 + $0x108] sm:$0xff]
    %v96 = vld [vmem:[#allocation4 + $0x110] sm:$0xff]
    %v97 = vld [vmem:[#allocation4 + $0x118] sm:$0xff]
    %v98 = vld [vmem:[#allocation4 + $0x120] sm:$0xff]
    %v99 = vld [vmem:[#allocation4 + $0x128] sm:$0xff]
    %v100 = vld [vmem:[#allocation4 + $0x130] sm:$0xff]
    %v101 = vld [vmem:[#allocation4 + $0x138] sm:$0xff]
    %v102 = vld [vmem:[#allocation4 + $0x140] sm:$0xff]
    %v103 = vld [vmem:[#allocation4 + $0x148] sm:$0xff]
    %v104 = vld [vmem:[#allocation4 + $0x150] sm:$0xff]
    %v105 = vld [vmem:[#allocation4 + $0x158] sm:$0xff]
    %v106 = vld [vmem:[#allocation4 + $0x160] sm:$0xff]
    %v107 = vld [vmem:[#allocation4 + $0x168] sm:$0xff]
    %v108 = vld [vmem:[#allocation4 + $0x170] sm:$0xff]
    %v109 = vld [vmem:[#allocation4 + $0x178] sm:$0xff]
    %v110 = vld [vmem:[#allocation4 + $0x180] sm:$0xff]
    %v111 = vld [vmem:[#allocation4 + $0x188] sm:$0xff]
    %v112 = vld [vmem:[#allocation4 + $0x190] sm:$0xff]
    %v113 = vld [vmem:[#allocation4 + $0x198] sm:$0xff]
    %v114 = vld [vmem:[#allocation4 + $0x1a0] sm:$0xff]
    %v115 = vld [vmem:[#allocation4 + $0x1a8] sm:$0xff]
    %v116 = vld [vmem:[#allocation4 + $0x1b0] sm:$0xff]
    %v117 = vld [vmem:[#allocation4 + $0x1b8] sm:$0xff]
    %v118 = vld [vmem:[#allocation4 + $0x1c0] sm:$0xff]
    %v119 = vld [vmem:[#allocation4 + $0x1c8] sm:$0xff]
    %v120 = vld [vmem:[#allocation4 + $0x1d0] sm:$0xff]
    %v121 = vld [vmem:[#allocation4 + $0x1d8] sm:$0xff]
    %v122 = vld [vmem:[#allocation4 + $0x1e0] sm:$0xff]
    %v123 = vld [vmem:[#allocation4 + $0x1e8] sm:$0xff]
    %v124 = vld [vmem:[#allocation4 + $0x1f0] sm:$0xff]
    %v125 = vld [vmem:[#allocation4 + $0x1f8] sm:$0xff]
    %v126 = vld [vmem:[%s2] sm:$0x3]
    %v128 = vlaneseq
    %v129 = vshrl.u32 %v128, 7
    %v130 = vsub.s32 0, %v129
    %v131 = vrot.slane %v126, %v130
    %v132 = vlaneseq
    %v133 = vshrl.u32 %v132, 7
    %v134 = vsub.s32 1, %v133
    %v135 = vrot.slane %v126, %v134
    %138 = vmatprep.subr.mxu0 %v93
    %139 = vmatpush1.msra.mxu0 %v92
    %140 = vmatprep.subr.mxu0 %v91
    %141 = vmatpush1.msra.mxu0 %v90
    %142 = vmatprep.subr.mxu0 %v89
    %143 = vmatpush1.msra.mxu0 %v88
    %144 = vmatprep.subr.mxu0 %v87
    %145 = vmatpush1.msra.mxu0 %v86
    %146 = vmatprep.subr.mxu0 %v85
    %147 = vmatpush1.msra.mxu0 %v84
    %148 = vmatprep.subr.mxu0 %v83
    %149 = vmatpush1.msra.mxu0 %v82
    %150 = vmatprep.subr.mxu0 %v81
    %151 = vmatpush1.msra.mxu0 %v80
    %152 = vmatprep.subr.mxu0 %v79
    %153 = vmatpush1.msra.mxu0 %v78
    %154 = vmatprep.subr.mxu0 %v77
    %155 = vmatpush1.msra.mxu0 %v76
    %156 = vmatprep.subr.mxu0 %v75
    %157 = vmatpush1.msra.mxu0 %v74
    %158 = vmatprep.subr.mxu0 %v73
    %159 = vmatpush1.msra.mxu0 %v72
    %160 = vmatprep.subr.mxu0 %v71
    %161 = vmatpush1.msra.mxu0 %v70
    %162 = vmatprep.subr.mxu0 %v69
    %163 = vmatpush1.msra.mxu0 %v68
    %164 = vmatprep.subr.mxu0 %v67
    %165 = vmatpush1.msra.mxu0 %v66
    %166 = vmatprep.subr.mxu0 %v65
    %167 = vmatpush1.msra.mxu0 %v64
    %168 = vmatprep.subr.mxu0 %v63
    %169 = vmatpush1.msra.mxu0 %v62
    %170 = vmatprep.subr.mxu0 %v125
    %171 = vmatpush2.msra.mxu0 %v124
    %172 = vmatprep.subr.mxu0 %v123
    %173 = vmatpush2.msra.mxu0 %v122
    %174 = vmatprep.subr.mxu0 %v121
    %175 = vmatpush2.msra.mxu0 %v120
    %176 = vmatprep.subr.mxu0 %v119
    %177 = vmatpush2.msra.mxu0 %v118
    %178 = vmatprep.subr.mxu0 %v117
    %179 = vmatpush2.msra.mxu0 %v116
    %180 = vmatprep.subr.mxu0 %v115
    %181 = vmatpush2.msra.mxu0 %v114
    %182 = vmatprep.subr.mxu0 %v113
    %183 = vmatpush2.msra.mxu0 %v112
    %184 = vmatprep.subr.mxu0 %v111
    %185 = vmatpush2.msra.mxu0 %v110
    %186 = vmatprep.subr.mxu0 %v109
    %187 = vmatpush2.msra.mxu0 %v108
    %188 = vmatprep.subr.mxu0 %v107
    %189 = vmatpush2.msra.mxu0 %v106
    %190 = vmatprep.subr.mxu0 %v105
    %191 = vmatpush2.msra.mxu0 %v104
    %192 = vmatprep.subr.mxu0 %v103
    %193 = vmatpush2.msra.mxu0 %v102
    %194 = vmatprep.subr.mxu0 %v101
    %195 = vmatpush2.msra.mxu0 %v100
    %196 = vmatprep.subr.mxu0 %v99
    %197 = vmatpush2.msra.mxu0 %v98
    %198 = vmatprep.subr.mxu0 %v97
    %199 = vmatpush2.msra.mxu0 %v96
    %200 = vmatprep.subr.mxu0 %v95
    %201 = vmatpush2.msra.mxu0 %v94
    %202 = vmatprep.mubr.f32.mxu0 %v59
    %203 = vmatmul.mubr.f32.gmra.mxu0 %v58
    %v204 = vpop.f32.mrf.mxu0
    %v205 = vadd.f32 %v131, %v204
    %v206 = vpop.f32.mrf.mxu0
    %v207 = vadd.f32 %v135, %v206
    %208 = vmatprep.mubr.f32.mxu0 %v61
    %209 = vmatmul.mubr.f32.gmra.mxu0 %v60
    %v210 = vpop.f32.mrf.mxu0
    %v211 = vadd.f32 %v131, %v210
    %v212 = vpop.f32.mrf.mxu0
    %v213 = vadd.f32 %v135, %v212
    %214 = vdwg.mxu0
    %v215 = vmax.f32 %v205, 0.0
    %v216 = vmax.f32 %v207, 0.0
    %v217 = vmax.f32 %v211, 0.0
    %v218 = vmax.f32 %v213, 0.0
    %v219 = vmul.f32 %v216, 0.5
    %v220 = vmul.f32 %v218, 0.5
    %v221 = vmul.f32 %v219, 1.442695
    %v222 = vpow.pop %v221
    %v223 = vmul.f32 %v220, 1.442695
    %v224 = vpow.pop %v223
    %v225 = vld [vmem:[#allocation6] sm:$0xff]
    %v226 = vld [vmem:[#allocation6 + $0x8] sm:$0xff]
    %v227 = vmul.f32 %v225, %v222
    %v228 = vmul.f32 %v226, %v224
    %v229 = vadd.f32 %v227, %v215
    %v230 = vadd.f32 %v228, %v217
    %231 = vst [vmem:[%s4] sm:$0xff] %v229
    %232 = vst [vmem:[%s4 + $0x18] sm:$0xff] %v230
    %233 = vst [vmem:[%s4 + $0x8] sm:$0xff] %v215
    %234 = vst [vmem:[%s4 + $0x20] sm:$0xff] %v217
    %235 = vst [vmem:[%s4 + $0x10] sm:$0xff] %v216
    %236 = vst [vmem:[%s4 + $0x28] sm:$0xff] %v218
    // Predicated region
    $region30: #{ca_net_pallas.1} parent=1 // pred_check
      _
    $region31: #{ca_net_pallas.1} parent=1 // pred_check_branch
      %238 = sbr.rel (0) target = $region33
    $region32: #{ca_net_pallas.1} parent=1 // pred_region
      _
    $region33: #{ca_net_pallas.1} parent=1 // pred_fallthru
      _
    // Predicated region
    $region34: #{ca_net_pallas.1} parent=1 // pred_check
      _
    $region35: #{ca_net_pallas.1} parent=1 // pred_check_branch
      %240 = sbr.rel (0) target = $region37
    $region36: #{ca_net_pallas.1} parent=1 // pred_region
      _
    $region37: #{ca_net_pallas.1} parent=1 // pred_fallthru
      _
    %241 = vsyncpa [#allocation3], 1
    %242 = vsyncpa [#allocation5], 1

</llo_original>
